<compile_context>
chip_gen: v5e
topology: v5e:2x2
jax: 0.10.0
libtpu: 0.0.40
codegen_flags: <defaults>
</compile_context>

<pallas_src>
import jax
import jax.numpy as jnp
from jax.experimental import pallas as pl
from jax.experimental.pallas import tpu as pltpu


_SMALL_BYPASS_BYTES = 1 << 20  # < 1 MiB: launch overhead dominates -> plain XLA copy


def _dma_copy_kernel(x_hbm, o_hbm, sem):
    # Whole-array HBM->HBM DMA: no VMEM round-trip, no vld/vst slot work.
    cp = pltpu.make_async_copy(x_hbm, o_hbm, sem)
    cp.start()
    cp.wait()


def _dma_copy(x):
    """Fresh-buffer copy of `x` via a single HBM->HBM DMA (any shape, any dtype)."""
    nbytes = x.size * x.dtype.itemsize
    return pl.pallas_call(
        _dma_copy_kernel,
        out_shape=jax.ShapeDtypeStruct(x.shape, x.dtype),
        in_specs=[pl.BlockSpec(memory_space=pl.ANY)],
        out_specs=pl.BlockSpec(memory_space=pl.ANY),
        scratch_shapes=[pltpu.SemaphoreType.DMA],
        cost_estimate=pl.CostEstimate(
            flops=0, transcendentals=0, bytes_accessed=2 * nbytes),
    )(x)


def identity_encoder_forward(obs, *, detach=False, materialize=False):
    """Forward pass of IdentityEncoder.

    Default: return `obs` unchanged (no kernel, no copy).
    materialize=True: produce a fresh buffer (small-input XLA-copy bypass,
    otherwise a single whole-array HBM->HBM DMA).
    """
    out = obs
    if materialize:
        nbytes = obs.size * obs.dtype.itemsize
        if nbytes < _SMALL_BYPASS_BYTES:
            out = jnp.copy(obs)          # fused XLA copy beats a kernel launch here
        else:
            out = _dma_copy(obs)
    if detach:
        # Match PyTorch's detach semantics: block gradient flow.
        out = jax.lax.stop_gradient(out)
    return out


class IdentityEncoderPallas:
    """Mirror of the PyTorch IdentityEncoder (no parameters)."""

    def __init__(self, obs_shape, feature_dim, num_layers, num_filters, *args):
        assert len(obs_shape) == 1
        self.feature_dim = obs_shape[0]

    def __call__(self, obs, detach=False, materialize=False):
        return identity_encoder_forward(obs, detach=detach,
                                        materialize=materialize)

    def copy_conv_weights_from(self, source):
        pass  # no conv weights

    def log(self, L, step, log_freq):
        pass  # no-op logging


if __name__ == "__main__":
    key = jax.random.PRNGKey(0)
    batch, obs_dim = 2, 32  # small flat observation, consistent with the module
    obs = jax.random.normal(key, (batch, obs_dim), dtype=jnp.float32)

    enc = IdentityEncoderPallas((obs_dim,), feature_dim=50,
                                num_layers=2, num_filters=32)

    # Default (zero-copy) path — matches IdentityEncoder.forward exactly.
    out_fast = jax.block_until_ready(enc(obs))

    # materialize=True on a tiny input exercises the small-input XLA-copy bypass.
    out_mat = jax.block_until_ready(enc(obs, materialize=True))

    # Exercise the Pallas HBM->HBM DMA kernel directly (it is shape/dtype
    # agnostic — no padding or slice-back even for non-(8,128)-aligned shapes).
    out_dma = jax.block_until_ready(_dma_copy(obs))

    k2 = jax.random.PRNGKey(1)
    obs2 = jax.random.normal(k2, (17, 300), dtype=jnp.float32)   # unaligned shape
    out2 = jax.block_until_ready(_dma_copy(obs2))

    k3 = jax.random.PRNGKey(2)
    obs3 = jax.random.normal(k3, (16, 48), dtype=jnp.bfloat16)   # packed dtype
    out3 = jax.block_until_ready(_dma_copy(obs3))

    # detach path (stop_gradient) sanity check.
    out_det = jax.block_until_ready(enc(obs, detach=True))

    assert out_fast.shape == obs.shape and out_fast.dtype == obs.dtype
    assert jnp.array_equal(out_fast, obs)
    assert out_mat.shape == obs.shape and jnp.array_equal(out_mat, obs)
    assert out_dma.shape == obs.shape and out_dma.dtype == obs.dtype
    assert jnp.array_equal(out_dma, obs)
    assert out2.shape == obs2.shape and jnp.array_equal(out2, obs2)
    assert out3.shape == obs3.shape and out3.dtype == obs3.dtype
    assert jnp.array_equal(out3, obs3)
    assert jnp.array_equal(out_det, obs)
    print("KERNEL_OK")
</pallas_src>

<mosaic_0001>
module attributes {stable_mosaic.version = 11 : i64} {
  func.func @_dma_copy_kernel(%arg0: memref<2x32xf32, #tpu.memory_space<any>>, %arg1: memref<2x32xf32, #tpu.memory_space<any>>, %arg2: memref<!tpu.dma_semaphore, #tpu.memory_space<semaphore_mem>>) attributes {dimension_semantics = [], scalar_prefetch = 0 : i64, scratch_operands = 1 : i64, tpu.core_type = #tpu.core_type<tc>} {
    tpu.enqueue_dma source(%arg0 : memref<2x32xf32, #tpu.memory_space<any>>) target(%arg1 : memref<2x32xf32, #tpu.memory_space<any>>) target_semaphore(%arg2 : memref<!tpu.dma_semaphore, #tpu.memory_space<semaphore_mem>>)
    tpu.wait_dma2 semaphore(%arg2 : memref<!tpu.dma_semaphore, #tpu.memory_space<semaphore_mem>>) src(%arg0 : memref<2x32xf32, #tpu.memory_space<any>>) dst(%arg1 : memref<2x32xf32, #tpu.memory_space<any>>)
    return
  }
}

</mosaic_0001>

<llo_original>
// kernel: tpu_custom_call.1
$region0: #{tpu_custom_call.1}
  #allocation0 [shape = 'u32[]', space=smem, size = 0x4, offset = 0x4, fixed_abs, tag = 'smem constant byte address 0x4 - core index']
  #allocation1 [shape = 'u32[72,128]{1,0:T(1,128)}', space=vmem, size = 0x9000, scoped, tag = 'internal scratch']
  #allocation2 [shape = 's32[1]{0}', space=sflag, size = 0x4, scoped, tag = 'scratch operand']
  #allocation3 [shape = 's32[]', space=sflag, size = 0x4, offset = 0, fixed_abs, tag = 'sflag constant byte address 0x0 - dummy sync flag']
  #allocation4 [shape = 'u32[0]{0}', space=smem, size = 0, offset = 0, fixed_abs, tag = 'smem constant byte address 0x0 - null']
  %s0 = inlined_call_operand.hbm [shape: f32[2,32], index: 0, kind: input, shape index: {}]
  %s1 = inlined_call_operand.hbm [shape: f32[2,32], index: 1, kind: output, shape index: {}]
  %s2 = sld [smem:[#allocation0]]
  $region2: #{tpu_custom_call.1} parent=0
    _
  %s4 = ssub.s32 1, %s2
  %s5 = scalar_select 0, %s4, %s2
  %s7 = sshll.u32 1, 14
  %s8 = sxor.u32 4294967295, %s7
  %s10 = sshll.u32 %s0, 4
  %s11 = int_to_ptr.hbm [resolvable:$true] %s10
  %s12 = sshll.u32 %s1, 4
  %s13 = int_to_ptr.hbm [resolvable:$true] %s12
  %16 = dma.general %s11, 32, %s13, [#allocation2], [#allocation3], [#allocation4], 0, 0
  %s17 = smul.u32 2, 1
  %s18 = sshll.u32 %s17, 4
  %19 = dma.done [#allocation2], %s18
  %20 = vsyncmov [#allocation2]
  %s21 = vpop.sfrf %20
  %p22 = scmp.eq.s32.totalorder %s21, 0
  %p23 = pneg %p22
  %25 = shalt.err (%p23)

</llo_original>
